<compile_context>
chip_gen: v7x
topology: tpu7x:2x2x1
jax: 0.10.0
libtpu: 0.0.40
codegen_flags: <defaults>
</compile_context>

<pallas_src>
import jax
import jax.numpy as jnp
from jax.experimental import pallas as pl
from jax.experimental.pallas import tpu as pltpu


def mean_pooling_kernel(hidden_ref, mask_ref, out_ref, sum_emb_ref, sum_mask_ref):
    # hidden_ref: (ts, H) source dtype     mask_ref: (1, ts) source dtype
    # out_ref:    (1, H)  float32
    # sum_emb_ref (1, H) f32 scratch, sum_mask_ref (1, 1) f32 scratch
    k = pl.program_id(1)

    @pl.when(k == 0)
    def _init():
        sum_emb_ref[...] = jnp.zeros_like(sum_emb_ref)
        sum_mask_ref[...] = jnp.zeros_like(sum_mask_ref)

    h = hidden_ref[...]                       # (ts, H); narrow dtype stays narrow
    m = mask_ref[...].astype(h.dtype)         # (1, ts); 0/1 is exact in bf16/f32

    # Masked sum on the MXU (f32 accumulation); cast/mul/reduce leave the VPU.
    sum_emb_ref[...] += jnp.dot(m, h, preferred_element_type=jnp.float32)
    # Tiny mask count: one lane-reduction per tile, stays on the VPU/XLU.
    sum_mask_ref[...] += jnp.sum(mask_ref[...].astype(jnp.float32), axis=-1,
                                 keepdims=True)

    @pl.when(k == pl.num_programs(1) - 1)
    def _finalize():
        denom = jnp.maximum(sum_mask_ref[...], 1e-9)      # torch.clamp(min=1e-9)
        out_ref[...] = (sum_emb_ref[...] / denom).astype(out_ref.dtype)  # exact div


def _vmem_config():
    """Return (per-tile hidden-byte budget, vmem_limit_bytes) for this chip."""
    try:
        cap = getattr(pltpu.get_tpu_info(), "vmem_capacity_bytes", None)
    except Exception:
        cap = None
    if cap is not None and cap <= 80 * 1024 * 1024:
        # v7x-class: 64 MiB physical VMEM -> 2x-buffered tiles stay under ~30 MiB.
        return 10 * 1024 * 1024, 30 * 1024 * 1024
    # v5e / v6e: 128 MiB physical VMEM.
    return 14 * 1024 * 1024, 64 * 1024 * 1024


def _pick_seq_tile(S, H, itemsize, budget_bytes):
    """Full S if the (S, H) tile fits the budget, else the largest multiple of
    128 that does (>= 128)."""
    if S * H * itemsize <= budget_bytes:
        return S
    ts = (budget_bytes // (H * itemsize)) // 128 * 128
    return max(int(ts), 128)


def mean_pooling(last_hidden_state, attention_mask, *, seq_tile=None):
    """Pallas equivalent of MeanPooling.forward.

    last_hidden_state: [B, S, H] (any float dtype; accumulated in float32)
    attention_mask:    [B, S]    (int or float; cast in-kernel)
    returns:           [B, H]    float32
    """
    B, S, H = last_hidden_state.shape
    assert attention_mask.shape == (B, S)
    itemsize = jnp.dtype(last_hidden_state.dtype).itemsize

    budget, vmem_limit = _vmem_config()
    ts = seq_tile if seq_tile is not None else _pick_seq_tile(S, H, itemsize, budget)

    # Zero-pad the sequence axis so it tiles exactly. Numerically exact: padded
    # positions carry mask == 0 and contribute nothing to either sum.
    S_pad = pl.cdiv(S, ts) * ts
    if S_pad != S:
        pad = S_pad - S
        last_hidden_state = jnp.pad(last_hidden_state, ((0, 0), (0, pad), (0, 0)))
        attention_mask = jnp.pad(attention_mask, ((0, 0), (0, pad)))

    mask3 = attention_mask.reshape(B, 1, S_pad)   # free reshape; seq on lanes

    grid = (B, S_pad // ts)
    cost = pl.CostEstimate(
        flops=2 * B * S_pad * H,
        transcendentals=0,
        bytes_accessed=(B * S_pad * H * itemsize
                        + mask3.size * jnp.dtype(mask3.dtype).itemsize
                        + B * H * 4),
    )

    out = pl.pallas_call(
        mean_pooling_kernel,
        out_shape=jax.ShapeDtypeStruct((B, 1, H), jnp.float32),
        grid_spec=pltpu.PrefetchScalarGridSpec(
            num_scalar_prefetch=0,
            grid=grid,
            in_specs=[
                # Batch dim squeezed -> kernel sees (ts, H), lane-dense in H.
                pl.BlockSpec((None, ts, H), lambda b, k: (b, k, 0)),
                # Kernel sees (1, ts) with seq on lanes -> matmul-ready, no relayout.
                pl.BlockSpec((None, 1, ts), lambda b, k: (b, 0, k)),
            ],
            # Same output block across the seq axis -> resident (1, H) tile.
            out_specs=pl.BlockSpec((None, 1, H), lambda b, k: (b, 0, 0)),
            scratch_shapes=[
                pltpu.VMEM((1, H), jnp.float32),   # sum_embeddings accumulator
                pltpu.VMEM((1, 1), jnp.float32),   # sum_mask accumulator
            ],
        ),
        compiler_params=pltpu.CompilerParams(
            dimension_semantics=("parallel", "arbitrary"),
            vmem_limit_bytes=vmem_limit,
        ),
        cost_estimate=cost,
    )(last_hidden_state, mask3)

    return out.reshape(B, H)


def mean_pooling_ref(last_hidden_state, attention_mask):
    # Pure-JAX reference matching the PyTorch semantics exactly.
    m = attention_mask[:, :, None].astype(jnp.float32)
    h = last_hidden_state.astype(jnp.float32)
    sum_emb = jnp.sum(h * m, axis=1)
    sum_mask = jnp.maximum(jnp.sum(m, axis=1), 1e-9)
    return sum_emb / sum_mask


if __name__ == "__main__":
    key = jax.random.PRNGKey(0)
    k1, k2, k3, k4 = jax.random.split(key, 4)

    # --- Test 1: small module-spec shapes (f32 hidden, int mask), full-S tile ---
    B, S, H = 2, 8, 32
    hidden = jax.random.normal(k1, (B, S, H), dtype=jnp.float32)
    mask = (jax.random.uniform(k2, (B, S)) > 0.3).astype(jnp.int32)
    mask = mask.at[:, 0].set(1)  # at least one attended token per row

    out = jax.block_until_ready(mean_pooling(hidden, mask))
    ref = mean_pooling_ref(hidden, mask)
    assert out.shape == (B, H) and out.dtype == jnp.float32
    assert jnp.allclose(out, ref, atol=1e-5, rtol=1e-4), "mismatch vs reference (test 1)"

    # --- Test 2: bf16 hidden, ragged S (padding path), multi-tile seq reduction,
    #     fully-masked row (exercises the 1e-9 clamp), parallel batch axis ---
    B2, S2, H2 = 8, 200, 128
    hidden2 = jax.random.normal(k3, (B2, S2, H2), dtype=jnp.bfloat16)
    mask2 = (jax.random.uniform(k4, (B2, S2)) > 0.3).astype(jnp.int32)
    mask2 = mask2.at[:, 0].set(1)
    mask2 = mask2.at[0].set(0)   # fully-masked row

    out2 = jax.block_until_ready(
        mean_pooling(hidden2, mask2, seq_tile=128))  # S padded to 256, grid = (8, 2)
    ref2 = mean_pooling_ref(hidden2, mask2)
    assert out2.shape == (B2, H2) and out2.dtype == jnp.float32
    assert jnp.allclose(out2, ref2, atol=1e-4, rtol=1e-3), "mismatch vs reference (test 2)"

    print("KERNEL_OK")
</pallas_src>

<mosaic_0001>
module attributes {stable_mosaic.version = 11 : i64} {
  func.func @mean_pooling_kernel(%arg0: i32, %arg1: i32, %arg2: memref<1x8x32xf32, #tpu.memory_space<vmem>>, %arg3: memref<1x1x8xi32, #tpu.memory_space<vmem>>, %arg4: memref<1x1x32xf32, #tpu.memory_space<vmem>>, %arg5: memref<1x32xf32, #tpu.memory_space<vmem>>, %arg6: memref<1x1xf32, #tpu.memory_space<vmem>>) attributes {dimension_semantics = [#tpu.dimension_semantics<parallel>, #tpu.dimension_semantics<arbitrary>], iteration_bounds = array<i64: 2, 1>, scalar_prefetch = 0 : i64, scratch_operands = 2 : i64, tpu.core_type = #tpu.core_type<tc>, window_params = [{transform_indices = @transform_0, window_bounds = array<i64: 1, 8, 32>}, {transform_indices = @transform_1, window_bounds = array<i64: 1, 1, 8>}, {transform_indices = @transform_2, window_bounds = array<i64: 1, 1, 32>}]} {
    %c0_i32 = arith.constant 0 : i32
    %0 = arith.cmpi eq, %arg1, %c0_i32 : i32
    %1 = arith.extui %0 : i1 to i32
    %c0_i32_0 = arith.constant 0 : i32
    %2 = arith.cmpi ne, %1, %c0_i32_0 : i32
    scf.if %2 {
      %cst_20 = arith.constant 0.000000e+00 : f32
      %23 = vector.broadcast %cst_20 : f32 to vector<1x32xf32>
      %c0_21 = arith.constant 0 : index
      %c0_22 = arith.constant 0 : index
      %24 = vector.load %arg5[%c0_21, %c0_22] : memref<1x32xf32, #tpu.memory_space<vmem>>, vector<1x32xf32>
      tpu.vector_store %arg5[%c0_21, %c0_22], %23 {strides = array<i32>} : memref<1x32xf32, #tpu.memory_space<vmem>>, vector<1x32xf32>,
      %cst_23 = arith.constant 0.000000e+00 : f32
      %25 = vector.broadcast %cst_23 : f32 to vector<1x1xf32>
      %c0_24 = arith.constant 0 : index
      %c0_25 = arith.constant 0 : index
      %26 = vector.load %arg6[%c0_24, %c0_25] : memref<1x1xf32, #tpu.memory_space<vmem>>, vector<1x1xf32>
      tpu.vector_store %arg6[%c0_24, %c0_25], %25 {strides = array<i32>} : memref<1x1xf32, #tpu.memory_space<vmem>>, vector<1x1xf32>,
    } else {
    }
    %c0 = arith.constant 0 : index
    %c0_1 = arith.constant 0 : index
    %c0_2 = arith.constant 0 : index
    %3 = vector.load %arg2[%c0, %c0_1, %c0_2] : memref<1x8x32xf32, #tpu.memory_space<vmem>>, vector<1x8x32xf32>
    %4 = vector.shape_cast %3 : vector<1x8x32xf32> to vector<8x32xf32>
    %c0_3 = arith.constant 0 : index
    %c0_4 = arith.constant 0 : index
    %c0_5 = arith.constant 0 : index
    %5 = vector.load %arg3[%c0_3, %c0_4, %c0_5] : memref<1x1x8xi32, #tpu.memory_space<vmem>>, vector<1x1x8xi32>
    %6 = vector.shape_cast %5 : vector<1x1x8xi32> to vector<1x8xi32>
    %7 = arith.sitofp %6 : vector<1x8xi32> to vector<1x8xf32>
    %c0_6 = arith.constant 0 : index
    %c0_7 = arith.constant 0 : index
    %8 = vector.load %arg5[%c0_6, %c0_7] : memref<1x32xf32, #tpu.memory_space<vmem>>, vector<1x32xf32>
    %cst = arith.constant dense<0.000000e+00> : vector<1x32xf32>
    %9 = tpu.matmul %7, %4, %cst {dimension_numbers = #tpu.dot_dimension_numbers<[1], [0], [0], [1], [0, 0, 1, 1], [], []>} : vector<1x8xf32>, vector<8x32xf32>, vector<1x32xf32> -> vector<1x32xf32>
    %10 = arith.addf %8, %9 : vector<1x32xf32>
    %c0_8 = arith.constant 0 : index
    %c0_9 = arith.constant 0 : index
    %11 = vector.load %arg5[%c0_8, %c0_9] : memref<1x32xf32, #tpu.memory_space<vmem>>, vector<1x32xf32>
    tpu.vector_store %arg5[%c0_8, %c0_9], %10 {strides = array<i32>} : memref<1x32xf32, #tpu.memory_space<vmem>>, vector<1x32xf32>,
    %c0_10 = arith.constant 0 : index
    %c0_11 = arith.constant 0 : index
    %12 = vector.load %arg6[%c0_10, %c0_11] : memref<1x1xf32, #tpu.memory_space<vmem>>, vector<1x1xf32>
    %c0_12 = arith.constant 0 : index
    %c0_13 = arith.constant 0 : index
    %c0_14 = arith.constant 0 : index
    %13 = vector.load %arg3[%c0_12, %c0_13, %c0_14] : memref<1x1x8xi32, #tpu.memory_space<vmem>>, vector<1x1x8xi32>
    %14 = vector.shape_cast %13 : vector<1x1x8xi32> to vector<1x8xi32>
    %15 = arith.sitofp %14 : vector<1x8xi32> to vector<1x8xf32>
    %cst_15 = arith.constant dense<0.000000e+00> : vector<1xf32>
    %16 = vector.multi_reduction <add>, %15, %cst_15 [1] : vector<1x8xf32> to vector<1xf32>
    %17 = vector.shape_cast %16 : vector<1xf32> to vector<1x1xf32>
    %18 = arith.addf %12, %17 : vector<1x1xf32>
    %c0_16 = arith.constant 0 : index
    %c0_17 = arith.constant 0 : index
    %19 = vector.load %arg6[%c0_16, %c0_17] : memref<1x1xf32, #tpu.memory_space<vmem>>, vector<1x1xf32>
    tpu.vector_store %arg6[%c0_16, %c0_17], %18 {strides = array<i32>} : memref<1x1xf32, #tpu.memory_space<vmem>>, vector<1x1xf32>,
    %c0_i32_18 = arith.constant 0 : i32
    %20 = arith.cmpi eq, %arg1, %c0_i32_18 : i32
    %21 = arith.extui %20 : i1 to i32
    %c0_i32_19 = arith.constant 0 : i32
    %22 = arith.cmpi ne, %21, %c0_i32_19 : i32
    scf.if %22 {
      %c0_20 = arith.constant 0 : index
      %c0_21 = arith.constant 0 : index
      %23 = vector.load %arg6[%c0_20, %c0_21] : memref<1x1xf32, #tpu.memory_space<vmem>>, vector<1x1xf32>
      %cst_22 = arith.constant 9.99999971E-10 : f32
      %24 = vector.broadcast %cst_22 : f32 to vector<1x1xf32>
      %25 = arith.maximumf %23, %24 : vector<1x1xf32>
      %c0_23 = arith.constant 0 : index
      %c0_24 = arith.constant 0 : index
      %26 = vector.load %arg5[%c0_23, %c0_24] : memref<1x32xf32, #tpu.memory_space<vmem>>, vector<1x32xf32>
      %27 = vector.broadcast %25 : vector<1x1xf32> to vector<1x32xf32>
      %28 = arith.divf %26, %27 : vector<1x32xf32>
      %c0_25 = arith.constant 0 : index
      %c0_26 = arith.constant 0 : index
      %c0_27 = arith.constant 0 : index
      %29 = vector.load %arg4[%c0_25, %c0_26, %c0_27] : memref<1x1x32xf32, #tpu.memory_space<vmem>>, vector<1x1x32xf32>
      %30 = vector.shape_cast %29 : vector<1x1x32xf32> to vector<1x32xf32>
      %31 = vector.shape_cast %28 : vector<1x32xf32> to vector<1x1x32xf32>
      tpu.vector_store %arg4[%c0_25, %c0_26, %c0_27], %31 {strides = array<i32>} : memref<1x1x32xf32, #tpu.memory_space<vmem>>, vector<1x1x32xf32>,
    } else {
    }
    return
  }
  func.func @transform_0(%arg0: i32, %arg1: i32) -> (i32, i32, i32) {
    %c0_i32 = arith.constant 0 : i32
    %c0_i32_0 = arith.constant 0 : i32
    return %arg0, %arg1, %c0_i32 : i32, i32, i32
  }
  func.func @transform_1(%arg0: i32, %arg1: i32) -> (i32, i32, i32) {
    %c0_i32 = arith.constant 0 : i32
    %c0_i32_0 = arith.constant 0 : i32
    return %arg0, %c0_i32, %arg1 : i32, i32, i32
  }
  func.func @transform_2(%arg0: i32, %arg1: i32) -> (i32, i32, i32) {
    %c0_i32 = arith.constant 0 : i32
    %c0_i32_0 = arith.constant 0 : i32
    %c0_i32_1 = arith.constant 0 : i32
    return %arg0, %c0_i32, %c0_i32_0 : i32, i32, i32
  }
}

</mosaic_0001>

<llo_original>
// kernel: tpu_custom_call.1
$region0: #{tpu_custom_call.1}
  #allocation0 [shape = 'u32[]', space=smem, size = 0x4, offset = 0x4, fixed_abs, tag = 'smem constant byte address 0x4 - core index']
  #allocation1 [shape = 'u32[144,128]{1,0:T(1,128)}', space=vmem, size = 0x12000, scoped, tag = 'internal scratch']
  #allocation2 [shape = 'f32[1,32]{1,0:T(1,128)}', space=vmem, size = 0x200, scoped, tag = 'scratch operand']
  #allocation3 [shape = 'f32[1,1]{1,0:T(1,128)}', space=vmem, size = 0x200, scoped, tag = 'scratch operand']
  %s0 = inlined_call_operand.hbm [shape: f32[2,8,32], index: 0, kind: input, shape index: {}]
  %s1 = inlined_call_operand.hbm [shape: s32[2,1,8], index: 1, kind: input, shape index: {}]
  %s2 = inlined_call_operand.hbm [shape: f32[2,1,32], index: 2, kind: output, shape index: {}]
  %s3 = sld [smem:[#allocation0]]
  $region57: #{tpu_custom_call.1} parent=0
    _
  %s5 = ssub.s32 1, %s3
  %s6 = scalar_select 0, %s5, %s3
  $region1: #{tpu_custom_call.1} parent=0
    #allocation4 [shape = 'u8[8192]{0}', space=vmem, size = 0x2000, scoped, tag = 'input window, operand 0']
    #allocation5 [shape = 's32[2]{0}', space=sflag, size = 0x8, scoped, tag = 'scoped memory for tpu_custom_call.1']
    #allocation6 [shape = 's32[2]{0}', space=sflag, size = 0x8, scoped, tag = 'scoped memory for tpu_custom_call.1']
    #allocation7 [shape = 'u8[1024]{0}', space=vmem, size = 0x400, scoped, tag = 'input window, operand 1']
    #allocation8 [shape = 's32[2]{0}', space=sflag, size = 0x8, scoped, tag = 'scoped memory for tpu_custom_call.1']
    #allocation9 [shape = 'u8[1024]{0}', space=vmem, size = 0x400, scoped, tag = 'output window, operand 0']
    %7 = vsyncpa [#allocation5], 0
    %s8 = scalar_lea.sflag [#allocation5], 1
    %9 = vsyncpa %s8, 0
    %10 = vsyncpa [#allocation8], 0
    %s11 = scalar_lea.sflag [#allocation8], 1
    %12 = vsyncpa %s11, 0
    %13 = vsyncpa [#allocation6], 0
    %s14 = scalar_lea.sflag [#allocation6], 1
    %15 = vsyncpa %s14, 0
    loop: start=0, step=1, limit=4
    $region2: #{tpu_custom_call.1} parent=1 // loop_pre_header
      _
    $region3: #{tpu_custom_call.1} parent=1 // loop_header
      %s17 = sphi 0, %s21
      %p18 = scmp.ge.s32.totalorder %s17, 4
      %s24 = sphi 0, %s36
      %s25 = sphi 0, %s32
      %s26 = sphi 0, %s24
      %s27 = sphi 0, %s25
      %s28 = sphi 0, %s26
      %s29 = sphi 0, %s27
      %s41 = sphi 0, %s43
      %s44 = sphi 0, %s41
      %s45 = sphi 0, %s44
      %s61 = sphi 0, %s45
      %s69 = sphi 0, %s71
      %s72 = sphi 0, %s69
      %s73 = sphi 0, %s72
      %s89 = sphi 0, %s73
      %s95 = sphi 0, %s97
      %s98 = sphi 0, %s95
      %s99 = sphi 0, %s98
      %s115 = sphi 0, %s99
    $region4: #{tpu_custom_call.1} parent=1 // loop_header_branch
      %20 = sbr.rel (%p18) target = $region8
    $region5: #{tpu_custom_call.1} parent=1 // loop_body
      %s22 = ssub.s32 %s17, 1
      %s23 = ssub.s32 %s17, 2
      %s30 = sadd.s32 1, %s25
      %p31 = scmp.ge.s32.totalorder %s30, 1
      %s32 = scalar_select %p31, 0, %s30
      %s33 = sadd.s32 1, %s24
      %s34 = scalar_select %p31, %s33, %s24
      %p35 = scmp.ge.s32.totalorder %s34, 2
      %s36 = scalar_select %p35, 0, %s34
      %s37 = ssub.s32 %s24, %s36
      %s38 = ssub.s32 %s25, %s32
      %s39 = sor.u32 %s37, %s38
      %p40 = scmp.eq.s32.totalorder %s39, 0
      %s42 = sadd.s32 %s41, 1
      %s43 = scalar_select %p40, %s41, %s42
      %p46 = pneg %p40
      %p47 = scmp.eq.s32.totalorder %s17, 1
      %p48 = por %p46, %p47
      %p49 = scmp.ne.s32.totalorder %s41, %s44
      %p50 = scmp.eq.s32.totalorder %s17, 0
      %p51 = por %p49, %p50
      %p52 = scmp.ne.s32.totalorder %s41, %s44
      %p53 = scmp.eq.s32.totalorder %s22, 1
      %p54 = por %p52, %p53
      %p55 = scmp.ne.s32.totalorder %s44, %s45
      %p56 = scmp.eq.s32.totalorder %s22, 0
      %p57 = por %p55, %p56
      %p58 = scmp.ne.s32.totalorder %s44, %s45
      %p59 = scmp.eq.s32.totalorder %s23, 1
      %p60 = por %p58, %p59
      %p62 = scmp.ne.s32.totalorder %s45, %s61
      %p63 = scmp.eq.s32.totalorder %s23, 0
      %p64 = por %p62, %p63
      %s65 = ssub.s32 %s24, %s36
      %s66 = ssub.s32 %s25, %s32
      %s67 = sor.u32 %s65, %s66
      %p68 = scmp.eq.s32.totalorder %s67, 0
      %s70 = sadd.s32 %s69, 1
      %s71 = scalar_select %p68, %s69, %s70
      %p74 = pneg %p68
      %p75 = scmp.eq.s32.totalorder %s17, 1
      %p76 = por %p74, %p75
      %p77 = scmp.ne.s32.totalorder %s69, %s72
      %p78 = scmp.eq.s32.totalorder %s17, 0
      %p79 = por %p77, %p78
      %p80 = scmp.ne.s32.totalorder %s69, %s72
      %p81 = scmp.eq.s32.totalorder %s22, 1
      %p82 = por %p80, %p81
      %p83 = scmp.ne.s32.totalorder %s72, %s73
      %p84 = scmp.eq.s32.totalorder %s22, 0
      %p85 = por %p83, %p84
      %p86 = scmp.ne.s32.totalorder %s72, %s73
      %p87 = scmp.eq.s32.totalorder %s23, 1
      %p88 = por %p86, %p87
      %p90 = scmp.ne.s32.totalorder %s73, %s89
      %p91 = scmp.eq.s32.totalorder %s23, 0
      %p92 = por %p90, %p91
      %s93 = ssub.s32 %s24, %s36
      %p94 = scmp.eq.s32.totalorder %s93, 0
      %s96 = sadd.s32 %s95, 1
      %s97 = scalar_select %p94, %s95, %s96
      %p100 = pneg %p94
      %p101 = scmp.eq.s32.totalorder %s17, 1
      %p102 = por %p100, %p101
      %p103 = scmp.ne.s32.totalorder %s95, %s98
      %p104 = scmp.eq.s32.totalorder %s17, 0
      %p105 = por %p103, %p104
      %p106 = scmp.ne.s32.totalorder %s95, %s98
      %p107 = scmp.eq.s32.totalorder %s22, 1
      %p108 = por %p106, %p107
      %p109 = scmp.ne.s32.totalorder %s98, %s99
      %p110 = scmp.eq.s32.totalorder %s22, 0
      %p111 = por %p109, %p110
      %p112 = scmp.ne.s32.totalorder %s98, %s99
      %p113 = scmp.eq.s32.totalorder %s23, 1
      %p114 = por %p112, %p113
      %p116 = scmp.ne.s32.totalorder %s99, %s115
      %p117 = scmp.eq.s32.totalorder %s23, 0
      %p118 = por %p116, %p117
      %p119 = scmp.le.s32.totalorder 1, %s17
      %p120 = scmp.lt.s32.totalorder %s17, 3
      %p121 = pnand %p119, %p120
      %p122 = pneg %p121
      // Predicated region
      $region9: #{tpu_custom_call.1} parent=5 // pred_check
        _
      $region10: #{tpu_custom_call.1} parent=5 // pred_check_branch
        %124 = sbr.rel (%p121) target = $region12
      $region11: #{tpu_custom_call.1} parent=5 // pred_region
        %s125 = ssub.s32 %s17, 1
      $region12: #{tpu_custom_call.1} parent=5 // pred_fallthru
        _
      %p126 = scmp.lt.s32.totalorder %s17, 2
      // Predicated region
      $region13: #{tpu_custom_call.1} parent=5 // pred_check
        %p127 = pneg %p126
      $region14: #{tpu_custom_call.1} parent=5 // pred_check_branch
        %129 = sbr.rel (%p127) target = $region16
      $region15: #{tpu_custom_call.1} parent=5 // pred_region
        // Predicated region
        $region17: #{tpu_custom_call.1} parent=15 // pred_check
          %p130 = pneg %p51
        $region18: #{tpu_custom_call.1} parent=15 // pred_check_branch
          %132 = sbr.rel (%p130) target = $region20
        $region19: #{tpu_custom_call.1} parent=15 // pred_region
          %s133 = sand.u32 %s41, 1
          %s134 = scalar_lea.sflag [#allocation5], %s133
          %s135 = sand.u32 %s41, 1
          %s136 = smul.addr %s135, 8
          %s137 = scalar_lea.vmem [#allocation4], %s136
          %s139 = ssub.s32 128, 128
          %140 = vsyncadd %s134, %s139
          %s141 = sadd.s32 %s25, %s24
          %s142 = smul.addr %s141, 128
          %s143 = scalar_lea.hbm %s0, %s142
          %s145 = sshll.u32 %s137, 4
          %s146 = int_to_ptr.vmem [resolvable:$true] %s145
          %148 = dma.hbm_to_vmem [thread:$0]  %s143, 128, %s146, %s134
        $region20: #{tpu_custom_call.1} parent=15 // pred_fallthru
          _
        // Predicated region
        $region21: #{tpu_custom_call.1} parent=15 // pred_check
          %p149 = pneg %p79
        $region22: #{tpu_custom_call.1} parent=15 // pred_check_branch
          %151 = sbr.rel (%p149) target = $region24
        $region23: #{tpu_custom_call.1} parent=15 // pred_region
          %s152 = sand.u32 %s69, 1
          %s153 = scalar_lea.sflag [#allocation8], %s152
          %s154 = sand.u32 %s69, 1
          %s155 = scalar_lea.vmem [#allocation7], %s154
          %s157 = ssub.s32 16, 16
          %158 = vsyncadd %s153, %s157
          %s159 = sadd.s32 %s25, %s24
          %s160 = smul.addr %s159, 16
          %s161 = scalar_lea.hbm %s1, %s160
          %s163 = sshll.u32 %s155, 4
          %s164 = int_to_ptr.vmem [resolvable:$true] %s163
          %166 = dma.hbm_to_vmem [thread:$0]  %s161, 16, %s164, %s153
        $region24: #{tpu_custom_call.1} parent=15 // pred_fallthru
          _
      $region16: #{tpu_custom_call.1} parent=5 // pred_fallthru
        _
      %p167 = scmp.le.s32.totalorder 1, %s17
      %p168 = scmp.lt.s32.totalorder %s17, 3
      %p169 = pnand %p167, %p168
      %p170 = pneg %p169
      // Predicated region
      $region25: #{tpu_custom_call.1} parent=5 // pred_check
        _
      $region26: #{tpu_custom_call.1} parent=5 // pred_check_branch
        %172 = sbr.rel (%p169) target = $region28
      $region27: #{tpu_custom_call.1} parent=5 // pred_region
        %s173 = ssub.s32 %s17, 1
        %s174 = sand.u32 %s44, 1
        %s175 = scalar_lea.sflag [#allocation5], %s174
        %s176 = sand.u32 %s44, 1
        %s177 = smul.addr %s176, 8
        %s178 = scalar_lea.vmem [#allocation4], %s177
        // Predicated region
        $region29: #{tpu_custom_call.1} parent=27 // pred_check
          %p179 = pneg %p57
        $region30: #{tpu_custom_call.1} parent=27 // pred_check_branch
          %181 = sbr.rel (%p179) target = $region32
        $region31: #{tpu_custom_call.1} parent=27 // pred_region
          %182 = dma.done %s175, 128
        $region32: #{tpu_custom_call.1} parent=27 // pred_fallthru
          _
        %s183 = sand.u32 %s72, 1
        %s184 = scalar_lea.sflag [#allocation8], %s183
        %s185 = sand.u32 %s72, 1
        %s186 = scalar_lea.vmem [#allocation7], %s185
        // Predicated region
        $region33: #{tpu_custom_call.1} parent=27 // pred_check
          %p187 = pneg %p85
        $region34: #{tpu_custom_call.1} parent=27 // pred_check_branch
          %189 = sbr.rel (%p187) target = $region36
        $region35: #{tpu_custom_call.1} parent=27 // pred_region
          %190 = dma.done %s184, 16
        $region36: #{tpu_custom_call.1} parent=27 // pred_fallthru
          _
        %s191 = sand.u32 %s44, 1
        %s192 = scalar_lea.sflag [#allocation5], %s191
        %s193 = sand.u32 %s44, 1
        %s194 = smul.addr %s193, 8
        %s195 = scalar_lea.vmem [#allocation4], %s194
        %p196 = pneg %p57
        %p197 = pneg %p54
        %s198 = sand.u32 %s72, 1
        %s199 = scalar_lea.sflag [#allocation8], %s198
        %s200 = sand.u32 %s72, 1
        %s201 = scalar_lea.vmem [#allocation7], %s200
        %p202 = pneg %p85
        %p203 = pneg %p82
        %p204 = pneg %p111
        %p205 = pneg %p108
        %s206 = sand.u32 %s98, 1
        %s207 = scalar_lea.sflag [#allocation6], %s206
        %s208 = sand.u32 %s98, 1
        %s209 = scalar_lea.vmem [#allocation9], %s208
        %p210 = scmp.eq.s32.totalorder %s27, 0
        // Predicated region
        $region37: #{tpu_custom_call.1} parent=27 // pred_check
          %p211 = pneg %p210
        $region38: #{tpu_custom_call.1} parent=27 // pred_check_branch
          %213 = sbr.rel (%p211) target = $region40
        $region39: #{tpu_custom_call.1} parent=27 // pred_region
          %vm214 = vcmask 253952
          %215 = vst.msk [vmem:[#allocation2] sm:$0x1] %vm214, 0.0
          %vm216 = vcmask 0
          %217 = vst.msk [vmem:[#allocation3] sm:$0x1] %vm216, 0.0
        $region40: #{tpu_custom_call.1} parent=27 // pred_fallthru
          _
        %v218 = vld [vmem:[%s178] sm:$0xff]
        %v219 = vld [vmem:[%s186] sm:$0x1]
        %v220 = vcvt.s32.f32 %v219
        %v221 = vld [vmem:[#allocation2] sm:$0x1]
        %vm222 = vcmask 64512
        %v224 = vsel %vm222, %v220, 0
        %226 = vmatprep.subr.mxu0 0.0
        %227 = vmatpush1.msra.mxu0 %v218
        %228 = vmatprep.subr.mxu0 0.0
        %229 = vmatpush1.msra.mxu0 0.0
        %230 = vmatprep.subr.mxu0 0.0
        %231 = vmatpush1.msra.mxu0 0.0
        %232 = vmatprep.subr.mxu0 0.0
        %233 = vmatpush1.msra.mxu0 0.0
        %234 = vmatprep.subr.mxu0 0.0
        %235 = vmatpush1.msra.mxu0 0.0
        %236 = vmatprep.subr.mxu0 0.0
        %237 = vmatpush1.msra.mxu0 0.0
        %238 = vmatprep.subr.mxu0 0.0
        %239 = vmatpush1.msra.mxu0 0.0
        %240 = vmatprep.subr.mxu0 0.0
        %241 = vmatpush1.msra.mxu0 0.0
        %242 = vmatprep.subr.mxu0 0.0
        %243 = vmatpush1.msra.mxu0 0.0
        %244 = vmatprep.subr.mxu0 0.0
        %245 = vmatpush1.msra.mxu0 0.0
        %246 = vmatprep.subr.mxu0 0.0
        %247 = vmatpush1.msra.mxu0 0.0
        %248 = vmatprep.subr.mxu0 0.0
        %249 = vmatpush1.msra.mxu0 0.0
        %250 = vmatprep.subr.mxu0 0.0
        %251 = vmatpush1.msra.mxu0 0.0
        %252 = vmatprep.subr.mxu0 0.0
        %253 = vmatpush1.msra.mxu0 0.0
        %254 = vmatprep.subr.mxu0 0.0
        %255 = vmatpush1.msra.mxu0 0.0
        %256 = vmatprep.subr.mxu0 0.0
        %257 = vmatpush1.msra.mxu0 0.0
        %258 = vmatprep.subr.mxu0 0.0
        %259 = vmatpush1.msra.mxu0 0.0
        %260 = vmatprep.subr.mxu0 0.0
        %261 = vmatpush1.msra.mxu0 0.0
        %262 = vmatprep.subr.mxu0 0.0
        %263 = vmatpush1.msra.mxu0 0.0
        %264 = vmatprep.subr.mxu0 0.0
        %265 = vmatpush1.msra.mxu0 0.0
        %266 = vmatprep.subr.mxu0 0.0
        %267 = vmatpush1.msra.mxu0 0.0
        %268 = vmatprep.subr.mxu0 0.0
        %269 = vmatpush1.msra.mxu0 0.0
        %270 = vmatprep.subr.mxu0 0.0
        %271 = vmatpush1.msra.mxu0 0.0
        %272 = vmatprep.subr.mxu0 0.0
        %273 = vmatpush1.msra.mxu0 0.0
        %274 = vmatprep.subr.mxu0 0.0
        %275 = vmatpush1.msra.mxu0 0.0
        %276 = vmatprep.subr.mxu0 0.0
        %277 = vmatpush1.msra.mxu0 0.0
        %278 = vmatprep.subr.mxu0 0.0
        %279 = vmatpush1.msra.mxu0 0.0
        %280 = vmatprep.subr.mxu0 0.0
        %281 = vmatpush1.msra.mxu0 0.0
        %282 = vmatprep.subr.mxu0 0.0
        %283 = vmatpush1.msra.mxu0 0.0
        %284 = vmatprep.subr.mxu0 0.0
        %285 = vmatpush1.msra.mxu0 0.0
        %286 = vmatprep.subr.mxu0 0.0
        %287 = vmatpush1.msra.mxu0 0.0
        %288 = vmatprep.subr.mxu0 0.0
        %289 = vmatpush1.msra.mxu0 0.0
        %290 = vmatprep.mubr.f32.mxu0 0.0
        %291 = vmatmul.mubr.f32.gmra.mrb[0].mxu0 %v224
        %v292 = vpop.f32.mrb[0].mxu0
        %v293 = vadd.f32 0.0, %v292
        %v294 = vpop.f32.mrb[0].mxu0
        %295 = vdwg.mxu0
        %v296 = vadd.f32 %v221, %v293
        %vm297 = vcmask 253952
        %298 = vst.msk [vmem:[#allocation2] sm:$0x1] %vm297, %v296
        %v299 = vld [vmem:[#allocation3] sm:$0x1]
        %v300 = vld [vmem:[%s186] sm:$0x1]
        %v301 = vcvt.s32.f32 %v300
        %vm302 = vcmask 57344
        %v303 = vsel %vm302, %v301, 0.0
        %304 = vadd.xlane.f32.xlu0 %v303
        %v305 = vpop.xlane.xlu0 %304
        %v306 = vadd.f32 %v299, %v305
        %vm307 = vcmask 0
        %308 = vst.msk [vmem:[#allocation3] sm:$0x1] %vm307, %v306
        // Predicated region
        $region41: #{tpu_custom_call.1} parent=27 // pred_check
          %p309 = pneg %p210
        $region42: #{tpu_custom_call.1} parent=27 // pred_check_branch
          %311 = sbr.rel (%p309) target = $region44
        $region43: #{tpu_custom_call.1} parent=27 // pred_region
          %v312 = vld [vmem:[#allocation3] sm:$0x1]
          %v313 = vmax.f32 %v312, 1e-09
          %v314 = vld [vmem:[#allocation2] sm:$0x1]
          %316 = vset.pattern.permute.xlu0 0
          %317 = vperm.xlu0 %316, %v313
          %v318 = vpop.permute.xlu0 %317
          %v320 = vlaneseq
          %v321 = vshrl.u32 %v320, 7
          %v322 = vsub.s32 0, %v321
          %v323 = vrot.slane %v318, %v322
          %v324 = vrcp.pop %v323
          %v325 = vmul.f32 %v314, %v324
          %326 = vst.msk [vmem:[%s209] sm:$0x1] %vm297, %v325
        $region44: #{tpu_custom_call.1} parent=27 // pred_fallthru
          _
        %s327 = sand.u32 %s98, 1
        %s328 = scalar_lea.sflag [#allocation6], %s327
        %s329 = sand.u32 %s98, 1
        %s330 = scalar_lea.vmem [#allocation9], %s329
        // Predicated region
        $region45: #{tpu_custom_call.1} parent=27 // pred_check
          %p331 = pneg %p108
        $region46: #{tpu_custom_call.1} parent=27 // pred_check_branch
          %333 = sbr.rel (%p331) target = $region48
        $region47: #{tpu_custom_call.1} parent=27 // pred_region
          %s335 = ssub.s32 16, 16
          %336 = vsyncadd %s328, %s335
          %s337 = smul.addr %s26, 16
          %s338 = scalar_lea.hbm %s2, %s337
          %s340 = sshll.u32 %s330, 4
          %s341 = int_to_ptr.vmem [resolvable:$true] %s340
          %343 = dma.vmem_to_hbm [thread:$0]  %s341, 16, %s338, %s328
        $region48: #{tpu_custom_call.1} parent=27 // pred_fallthru
          _
      $region28: #{tpu_custom_call.1} parent=5 // pred_fallthru
        _
      %p344 = scmp.le.s32.totalorder 2, %s17
      // Predicated region
      $region49: #{tpu_custom_call.1} parent=5 // pred_check
        %p345 = pneg %p344
      $region50: #{tpu_custom_call.1} parent=5 // pred_check_branch
        %347 = sbr.rel (%p345) target = $region52
      $region51: #{tpu_custom_call.1} parent=5 // pred_region
        %s348 = ssub.s32 %s17, 2
        // Predicated region
        $region53: #{tpu_custom_call.1} parent=51 // pred_check
          %p349 = pneg %p114
        $region54: #{tpu_custom_call.1} parent=51 // pred_check_branch
          %351 = sbr.rel (%p349) target = $region56
        $region55: #{tpu_custom_call.1} parent=51 // pred_region
          %s352 = sand.u32 %s99, 1
          %s353 = scalar_lea.sflag [#allocation6], %s352
          %s354 = sand.u32 %s99, 1
          %s355 = scalar_lea.vmem [#allocation9], %s354
          %356 = dma.done %s353, 16
        $region56: #{tpu_custom_call.1} parent=51 // pred_fallthru
          _
      $region52: #{tpu_custom_call.1} parent=5 // pred_fallthru
        _
    $region6: #{tpu_custom_call.1} parent=1 // loop_footer
      %s21 = sadd.s32 1, %s17
    $region7: #{tpu_custom_call.1} parent=1 // loop_footer_branch
      %16 = sbr.rel target = $region3
    $region8: #{tpu_custom_call.1} parent=1 // loop_exit
      _
    %357 = vsyncpa [#allocation5], 1
    %s358 = scalar_lea.sflag [#allocation5], 1
    %359 = vsyncpa %s358, 1
    %360 = vsyncpa [#allocation8], 1
    %s361 = scalar_lea.sflag [#allocation8], 1
    %362 = vsyncpa %s361, 1
    %363 = vsyncpa [#allocation6], 1
    %s364 = scalar_lea.sflag [#allocation6], 1
    %365 = vsyncpa %s364, 1

</llo_original>
